<compile_context>
chip_gen: v6e
topology: v6e:2x2x1
jax: 0.10.0
libtpu: 0.0.40
codegen_flags: <defaults>
</compile_context>

<pallas_src>
import jax
import jax.numpy as jnp
import numpy as np
from jax.experimental import pallas as pl
from jax.experimental.pallas import tpu as pltpu

# ----------------------------------------------------------------------------
# Model configuration (small, deterministic)
# ----------------------------------------------------------------------------
DIM = 32                      # config.dim
GNN_LAYERS = [64]             # config.gnn_layers
MLP_LAYERS = [32]             # config.mlp_layers
AGGR = "sum"                  # config.aggr
OUT_CARD = 5                  # card of the categorical target column

NODE_TYPES = ["user", "item"]
COLUMN_DEFS = {               # ('num',) or ('cat', cardinality)
    "user": [("num",), ("num",), ("cat", OUT_CARD)],
    "item": [("num",), ("cat", 7)],
}
EDGE_TYPES = [("user", "has", "item"), ("item", "rev_has", "user")]
TARGET_TABLE = "user"

NUM_NODES = {"user": 8, "item": 6}
NUM_EDGES = 12

GNN_OUT_DIM = MLP_LAYERS[0] if MLP_LAYERS else OUT_CARD
GNN_LAYER_DIMS = [*GNN_LAYERS, GNN_OUT_DIM]               # [64, 32]
NODE_IN_DIMS = {nt: len(cds) * DIM for nt, cds in COLUMN_DEFS.items()}

# padded / derived constants used by the fused kernel
N_USER = NUM_NODES["user"]          # 8  (already a sublane multiple)
N_ITEM_PAD = 8                      # item nodes padded 6 -> 8
CARD_USER = OUT_CARD                # 5
CARD_ITEM = 7
OUT_PAD = 128                       # lane-dense padded MLP output width


# ----------------------------------------------------------------------------
# Fused Pallas kernel: embeddings + 2 GNN layers + MLP, single program
# ----------------------------------------------------------------------------
def fused_forward_kernel(
    x_user_ref, x_item_ref,
    u_w0_ref, u_b0_ref, u_w1_ref, u_b1_ref, u_tab_ref,
    i_w0_ref, i_b0_ref, i_tab_ref,
    adj_iu_ref, adj_ui_ref,
    w0_user_ref, b0_user_ref, w0_item_ref, b0_item_ref,
    w1_user_ref, b1_user_ref,
    w_mlp_ref, b_mlp_ref,
    out_ref,
):
    f32, bf16 = jnp.float32, jnp.bfloat16

    def mm(a, b):
        # bf16 MXU operands, f32 accumulation; elementwise math stays f32.
        return jnp.dot(a.astype(bf16), b.astype(bf16), preferred_element_type=f32)

    xu = x_user_ref[...]                                        # [8, 3]
    xi = x_item_ref[...]                                        # [8, 2] (rows 6,7 are pad)

    # ---- MultiTableEmbedder ---------------------------------------------------
    # numeric columns: scalar -> DIM affine; categorical: one-hot @ table (MXU)
    eu0 = xu[:, 0:1] * u_w0_ref[...] + u_b0_ref[...]            # [8, 32]
    eu1 = xu[:, 1:2] * u_w1_ref[...] + u_b1_ref[...]            # [8, 32]
    cu = xu[:, 2:3].astype(jnp.int32)
    iota_u = jax.lax.broadcasted_iota(jnp.int32, (N_USER, CARD_USER), 1)
    oh_u = jnp.where(iota_u == cu, 1.0, 0.0)                    # [8, 5]
    eu2 = mm(oh_u, u_tab_ref[...])                              # [8, 32]
    h_user = jnp.concatenate([eu0, eu1, eu2], axis=-1)          # [8, 96]

    ei0 = xi[:, 0:1] * i_w0_ref[...] + i_b0_ref[...]            # [8, 32]
    ci = xi[:, 1:2].astype(jnp.int32)
    iota_i = jax.lax.broadcasted_iota(jnp.int32, (N_ITEM_PAD, CARD_ITEM), 1)
    oh_i = jnp.where(iota_i == ci, 1.0, 0.0)                    # [8, 7]
    ei1 = mm(oh_i, i_tab_ref[...])                              # [8, 32]
    h_item = jnp.concatenate([ei0, ei1], axis=-1)               # [8, 64]

    adj_iu = adj_iu_ref[...]                                    # [8 user, 8 item] (dst=user)
    adj_ui = adj_ui_ref[...]                                    # [8 item, 8 user] (dst=item)

    # ---- HeteroGNN layer 0 (ReLU) ---------------------------------------------
    # sum-aggregation == adjacency matmul; self + message paths fused into one
    # larger-K matmul: [x_dst | adj @ x_src] @ [W_self; W_msg] + b
    feat_u = jnp.concatenate([h_user, mm(adj_iu, h_item)], axis=-1)       # [8, 160]
    hu = jnp.maximum(mm(feat_u, w0_user_ref[...]) + b0_user_ref[...], 0.0)  # [8, 64]
    feat_i = jnp.concatenate([h_item, mm(adj_ui, h_user)], axis=-1)       # [8, 160]
    hi = jnp.maximum(mm(feat_i, w0_item_ref[...]) + b0_item_ref[...], 0.0)  # [8, 64]

    # ---- HeteroGNN layer 1 (no activation) ------------------------------------
    # Only the target table ('user') feeds the MLP; the item-side output of the
    # last layer is unused and therefore skipped (identical final output).
    feat_u2 = jnp.concatenate([hu, mm(adj_iu, hi)], axis=-1)              # [8, 128]
    hu2 = mm(feat_u2, w1_user_ref[...]) + b1_user_ref[...]                # [8, 32]

    # ---- MLP: ReLU -> Linear (lane-padded to 128-wide output store) -----------
    out_ref[...] = mm(jnp.maximum(hu2, 0.0), w_mlp_ref[...]) + b_mlp_ref[...]


def _vmem_spec():
    return pl.BlockSpec(memory_space=pltpu.MemorySpace.VMEM)


def _fused_pallas_call(*args):
    bytes_accessed = (
        sum(int(np.prod(a.shape)) * a.dtype.itemsize for a in args)
        + N_USER * OUT_PAD * 4
    )
    return pl.pallas_call(
        fused_forward_kernel,
        out_shape=jax.ShapeDtypeStruct((N_USER, OUT_PAD), jnp.float32),
        in_specs=[_vmem_spec() for _ in args],
        out_specs=_vmem_spec(),
        cost_estimate=pl.CostEstimate(
            flops=520_000, transcendentals=0, bytes_accessed=bytes_accessed),
    )(*args)


@jax.jit
def model_forward(fp, x_user, x_item_pad, adj_iu, adj_ui):
    """Single compiled forward: one pallas_call + output slice."""
    out_pad = _fused_pallas_call(
        x_user, x_item_pad,
        fp["u_w0"], fp["u_b0"], fp["u_w1"], fp["u_b1"], fp["u_tab"],
        fp["i_w0"], fp["i_b0"], fp["i_tab"],
        adj_iu, adj_ui,
        fp["w0_user"], fp["b0_user"], fp["w0_item"], fp["b0_item"],
        fp["w1_user"], fp["b1_user"],
        fp["w_mlp"], fp["b_mlp"],
    )
    return out_pad[:, :OUT_CARD]


# ----------------------------------------------------------------------------
# Parameter initialization (deterministic) + one-time fused-parameter prep
# ----------------------------------------------------------------------------
def init_params(key):
    params = {"embed": {}, "gnn": [], "mlp": {}}
    scale = 0.1

    for nt in NODE_TYPES:
        p = {}
        for c, cd in enumerate(COLUMN_DEFS[nt]):
            key, k1, k2 = jax.random.split(key, 3)
            if cd[0] == "cat":
                p[f"col{c}_table"] = scale * jax.random.normal(k1, (cd[1], DIM), jnp.float32)
            else:
                p[f"col{c}_w"] = scale * jax.random.normal(k1, (1, DIM), jnp.float32)
                p[f"col{c}_b"] = scale * jax.random.normal(k2, (1, DIM), jnp.float32)
        params["embed"][nt] = p

    in_dims = dict(NODE_IN_DIMS)
    for d_out in GNN_LAYER_DIMS:
        layer = {"self": {}, "msg": {}}
        for nt in NODE_TYPES:
            key, k1, k2 = jax.random.split(key, 3)
            layer["self"][nt] = {
                "w": scale * jax.random.normal(k1, (in_dims[nt], d_out), jnp.float32),
                "b": scale * jax.random.normal(k2, (1, d_out), jnp.float32),
            }
        for et in EDGE_TYPES:
            src_nt = et[0]
            key, k1 = jax.random.split(key)
            layer["msg"][et] = {
                "w": scale * jax.random.normal(k1, (in_dims[src_nt], d_out), jnp.float32)
            }
        params["gnn"].append(layer)
        in_dims = {nt: d_out for nt in NODE_TYPES}

    key, k1, k2 = jax.random.split(key, 3)
    params["mlp"]["w"] = scale * jax.random.normal(k1, (MLP_LAYERS[0], OUT_CARD), jnp.float32)
    params["mlp"]["b"] = scale * jax.random.normal(k2, (1, OUT_CARD), jnp.float32)
    return params


def prepare_fused_params(params):
    """One-time prep: stack [W_self; W_msg] per (layer, dst type), pad MLP to 128 lanes."""
    et_iu = ("item", "rev_has", "user")   # incoming edge for dst=user
    et_ui = ("user", "has", "item")       # incoming edge for dst=item
    g0, g1 = params["gnn"][0], params["gnn"][1]
    eu, ei = params["embed"]["user"], params["embed"]["item"]

    w_mlp = jnp.zeros((MLP_LAYERS[0], OUT_PAD), jnp.float32).at[:, :OUT_CARD].set(params["mlp"]["w"])
    b_mlp = jnp.zeros((1, OUT_PAD), jnp.float32).at[:, :OUT_CARD].set(params["mlp"]["b"])

    return {
        "u_w0": eu["col0_w"], "u_b0": eu["col0_b"],
        "u_w1": eu["col1_w"], "u_b1": eu["col1_b"],
        "u_tab": eu["col2_table"],
        "i_w0": ei["col0_w"], "i_b0": ei["col0_b"],
        "i_tab": ei["col1_table"],
        "w0_user": jnp.concatenate([g0["self"]["user"]["w"], g0["msg"][et_iu]["w"]], axis=0),
        "b0_user": g0["self"]["user"]["b"],
        "w0_item": jnp.concatenate([g0["self"]["item"]["w"], g0["msg"][et_ui]["w"]], axis=0),
        "b0_item": g0["self"]["item"]["b"],
        "w1_user": jnp.concatenate([g1["self"]["user"]["w"], g1["msg"][et_iu]["w"]], axis=0),
        "b1_user": g1["self"]["user"]["b"],
        "w_mlp": w_mlp, "b_mlp": b_mlp,
    }


# ----------------------------------------------------------------------------
# Pure-JAX f32 reference (original, un-fused semantics) for validation
# ----------------------------------------------------------------------------
def _embed_table_ref(x, col_defs, p):
    embs = []
    for c, cd in enumerate(col_defs):
        if cd[0] == "cat":
            idx = x[:, c].astype(jnp.int32)
            embs.append(jnp.take(p[f"col{c}_table"], idx, axis=0))
        else:
            embs.append(x[:, c: c + 1] * p[f"col{c}_w"] + p[f"col{c}_b"])
    return jnp.stack(embs, axis=-2)


def reference_forward(params, x_dict, edge_dict):
    h = {nt: _embed_table_ref(x_dict[nt], COLUMN_DEFS[nt], params["embed"][nt]) for nt in NODE_TYPES}
    h = {nt: v.reshape(v.shape[0], -1) for nt, v in h.items()}
    adj = {}
    for et, ei in edge_dict.items():
        src_nt, _, dst_nt = et
        A = jnp.zeros((NUM_NODES[dst_nt], NUM_NODES[src_nt]), jnp.float32)
        adj[et] = A.at[ei[1], ei[0]].add(1.0)
    for l, d_out in enumerate(GNN_LAYER_DIMS):
        apply_relu = l < len(GNN_LAYER_DIMS) - 1
        p = params["gnn"][l]
        new_h = {}
        for nt in NODE_TYPES:
            acc = h[nt] @ p["self"][nt]["w"] + p["self"][nt]["b"]
            for et in EDGE_TYPES:
                if et[2] != nt:
                    continue
                acc = acc + adj[et] @ (h[et[0]] @ p["msg"][et]["w"])
            new_h[nt] = jnp.maximum(acc, 0.0) if apply_relu else acc
        h = new_h
    return jnp.maximum(h[TARGET_TABLE], 0.0) @ params["mlp"]["w"] + params["mlp"]["b"]


# ----------------------------------------------------------------------------
# Main
# ----------------------------------------------------------------------------
if __name__ == "__main__":
    root = jax.random.PRNGKey(0)
    k_params, k_xu, k_xi, k_cu, k_ci, k_e1, k_e2 = jax.random.split(root, 7)

    params = init_params(k_params)
    fused_params = prepare_fused_params(params)

    # node features: numeric ~ N(0,1); categorical columns hold integer codes (as f32)
    xu_num = jax.random.normal(k_xu, (NUM_NODES["user"], 2), jnp.float32)
    xu_cat = jax.random.randint(k_cu, (NUM_NODES["user"], 1), 0, OUT_CARD).astype(jnp.float32)
    x_user = jnp.concatenate([xu_num, xu_cat], axis=1)                       # [8, 3]

    xi_num = jax.random.normal(k_xi, (NUM_NODES["item"], 1), jnp.float32)
    xi_cat = jax.random.randint(k_ci, (NUM_NODES["item"], 1), 0, 7).astype(jnp.float32)
    x_item = jnp.concatenate([xi_num, xi_cat], axis=1)                       # [6, 2]

    # edge indices: row 0 = src node ids, row 1 = dst node ids
    e_ui = jnp.stack([
        jax.random.randint(k_e1, (NUM_EDGES,), 0, NUM_NODES["user"]),
        jax.random.randint(jax.random.fold_in(k_e1, 1), (NUM_EDGES,), 0, NUM_NODES["item"]),
    ])
    e_iu = jnp.stack([e_ui[1], e_ui[0]])   # reverse edges
    edge_dict = {
        ("user", "has", "item"): e_ui,
        ("item", "rev_has", "user"): e_iu,
    }

    # --- one-time static-graph precompute (outside the jitted per-step path) ---
    # item axis padded 6 -> 8; pad rows/cols are zero so they never contribute.
    x_item_pad = jnp.zeros((N_ITEM_PAD, x_item.shape[1]), jnp.float32).at[:NUM_NODES["item"]].set(x_item)
    adj_ui = jnp.zeros((N_ITEM_PAD, N_USER), jnp.float32).at[e_ui[1], e_ui[0]].add(1.0)  # dst=item
    adj_iu = jnp.zeros((N_USER, N_ITEM_PAD), jnp.float32).at[e_iu[1], e_iu[0]].add(1.0)  # dst=user

    out = model_forward(fused_params, x_user, x_item_pad, adj_iu, adj_ui)
    out = jax.block_until_ready(out)

    assert out.shape == (NUM_NODES["user"], OUT_CARD), out.shape
    assert jnp.all(jnp.isfinite(out))

    # validate against the un-fused pure-JAX f32 reference (bf16 MXU operands ->
    # generous but still structurally-meaningful tolerance)
    ref = reference_forward(params, {"user": x_user, "item": x_item}, edge_dict)
    np.testing.assert_allclose(np.asarray(out), np.asarray(ref), rtol=0.1, atol=0.3)

    print("KERNEL_OK")
</pallas_src>

<mosaic_0001>
module attributes {stable_mosaic.version = 11 : i64} {
  func.func @fused_forward_kernel(%arg0: memref<8x3xf32, #tpu.memory_space<vmem>>, %arg1: memref<8x2xf32, #tpu.memory_space<vmem>>, %arg2: memref<1x32xf32, #tpu.memory_space<vmem>>, %arg3: memref<1x32xf32, #tpu.memory_space<vmem>>, %arg4: memref<1x32xf32, #tpu.memory_space<vmem>>, %arg5: memref<1x32xf32, #tpu.memory_space<vmem>>, %arg6: memref<5x32xf32, #tpu.memory_space<vmem>>, %arg7: memref<1x32xf32, #tpu.memory_space<vmem>>, %arg8: memref<1x32xf32, #tpu.memory_space<vmem>>, %arg9: memref<7x32xf32, #tpu.memory_space<vmem>>, %arg10: memref<8x8xf32, #tpu.memory_space<vmem>>, %arg11: memref<8x8xf32, #tpu.memory_space<vmem>>, %arg12: memref<160x64xf32, #tpu.memory_space<vmem>>, %arg13: memref<1x64xf32, #tpu.memory_space<vmem>>, %arg14: memref<160x64xf32, #tpu.memory_space<vmem>>, %arg15: memref<1x64xf32, #tpu.memory_space<vmem>>, %arg16: memref<128x32xf32, #tpu.memory_space<vmem>>, %arg17: memref<1x32xf32, #tpu.memory_space<vmem>>, %arg18: memref<32x128xf32, #tpu.memory_space<vmem>>, %arg19: memref<1x128xf32, #tpu.memory_space<vmem>>, %arg20: memref<8x128xf32, #tpu.memory_space<vmem>>) attributes {dimension_semantics = [], scalar_prefetch = 0 : i64, scratch_operands = 0 : i64, tpu.core_type = #tpu.core_type<tc>} {
    %c0 = arith.constant 0 : index
    %c0_0 = arith.constant 0 : index
    %0 = vector.load %arg0[%c0, %c0_0] : memref<8x3xf32, #tpu.memory_space<vmem>>, vector<8x3xf32>
    %c0_1 = arith.constant 0 : index
    %c0_2 = arith.constant 0 : index
    %1 = vector.load %arg1[%c0_1, %c0_2] : memref<8x2xf32, #tpu.memory_space<vmem>>, vector<8x2xf32>
    %2 = vector.extract_strided_slice %0 {offsets = [0, 0], sizes = [8, 1], strides = [1, 1]} : vector<8x3xf32> to vector<8x1xf32>
    %c0_3 = arith.constant 0 : index
    %c0_4 = arith.constant 0 : index
    %3 = vector.load %arg2[%c0_3, %c0_4] : memref<1x32xf32, #tpu.memory_space<vmem>>, vector<1x32xf32>
    %4 = vector.broadcast %2 : vector<8x1xf32> to vector<8x32xf32>
    %5 = vector.broadcast %3 : vector<1x32xf32> to vector<8x32xf32>
    %6 = arith.mulf %4, %5 : vector<8x32xf32>
    %c0_5 = arith.constant 0 : index
    %c0_6 = arith.constant 0 : index
    %7 = vector.load %arg3[%c0_5, %c0_6] : memref<1x32xf32, #tpu.memory_space<vmem>>, vector<1x32xf32>
    %8 = vector.broadcast %7 : vector<1x32xf32> to vector<8x32xf32>
    %9 = arith.addf %6, %8 : vector<8x32xf32>
    %10 = vector.extract_strided_slice %0 {offsets = [0, 1], sizes = [8, 1], strides = [1, 1]} : vector<8x3xf32> to vector<8x1xf32>
    %c0_7 = arith.constant 0 : index
    %c0_8 = arith.constant 0 : index
    %11 = vector.load %arg4[%c0_7, %c0_8] : memref<1x32xf32, #tpu.memory_space<vmem>>, vector<1x32xf32>
    %12 = vector.broadcast %10 : vector<8x1xf32> to vector<8x32xf32>
    %13 = vector.broadcast %11 : vector<1x32xf32> to vector<8x32xf32>
    %14 = arith.mulf %12, %13 : vector<8x32xf32>
    %c0_9 = arith.constant 0 : index
    %c0_10 = arith.constant 0 : index
    %15 = vector.load %arg5[%c0_9, %c0_10] : memref<1x32xf32, #tpu.memory_space<vmem>>, vector<1x32xf32>
    %16 = vector.broadcast %15 : vector<1x32xf32> to vector<8x32xf32>
    %17 = arith.addf %14, %16 : vector<8x32xf32>
    %18 = vector.extract_strided_slice %0 {offsets = [0, 2], sizes = [8, 1], strides = [1, 1]} : vector<8x3xf32> to vector<8x1xf32>
    %19 = arith.fptosi %18 : vector<8x1xf32> to vector<8x1xi32>
    %20 = tpu.iota {dimensions = array<i32: 1>} : vector<8x5xi32>
    %21 = vector.broadcast %19 : vector<8x1xi32> to vector<8x5xi32>
    %22 = arith.cmpi eq, %20, %21 : vector<8x5xi32>
    %cst = arith.constant 1.000000e+00 : f32
    %cst_11 = arith.constant 0.000000e+00 : f32
    %23 = vector.broadcast %cst : f32 to vector<8x5xf32>
    %24 = vector.broadcast %cst_11 : f32 to vector<8x5xf32>
    %25 = arith.select %22, %23, %24 : vector<8x5xi1>, vector<8x5xf32>
    %c0_12 = arith.constant 0 : index
    %c0_13 = arith.constant 0 : index
    %26 = vector.load %arg6[%c0_12, %c0_13] : memref<5x32xf32, #tpu.memory_space<vmem>>, vector<5x32xf32>
    %27 = arith.truncf %25 : vector<8x5xf32> to vector<8x5xbf16>
    %28 = arith.truncf %26 : vector<5x32xf32> to vector<5x32xbf16>
    %cst_14 = arith.constant dense<0.000000e+00> : vector<8x32xf32>
    %29 = tpu.matmul %27, %28, %cst_14 {dimension_numbers = #tpu.dot_dimension_numbers<[1], [0], [0], [1], [0, 0, 1, 1], [], []>} : vector<8x5xbf16>, vector<5x32xbf16>, vector<8x32xf32> -> vector<8x32xf32>
    %30 = tpu.concatenate %9, %17, %29 in 1 : vector<8x32xf32>, vector<8x32xf32>, vector<8x32xf32> -> vector<8x96xf32>
    %31 = vector.extract_strided_slice %1 {offsets = [0, 0], sizes = [8, 1], strides = [1, 1]} : vector<8x2xf32> to vector<8x1xf32>
    %c0_15 = arith.constant 0 : index
    %c0_16 = arith.constant 0 : index
    %32 = vector.load %arg7[%c0_15, %c0_16] : memref<1x32xf32, #tpu.memory_space<vmem>>, vector<1x32xf32>
    %33 = vector.broadcast %31 : vector<8x1xf32> to vector<8x32xf32>
    %34 = vector.broadcast %32 : vector<1x32xf32> to vector<8x32xf32>
    %35 = arith.mulf %33, %34 : vector<8x32xf32>
    %c0_17 = arith.constant 0 : index
    %c0_18 = arith.constant 0 : index
    %36 = vector.load %arg8[%c0_17, %c0_18] : memref<1x32xf32, #tpu.memory_space<vmem>>, vector<1x32xf32>
    %37 = vector.broadcast %36 : vector<1x32xf32> to vector<8x32xf32>
    %38 = arith.addf %35, %37 : vector<8x32xf32>
    %39 = vector.extract_strided_slice %1 {offsets = [0, 1], sizes = [8, 1], strides = [1, 1]} : vector<8x2xf32> to vector<8x1xf32>
    %40 = arith.fptosi %39 : vector<8x1xf32> to vector<8x1xi32>
    %41 = tpu.iota {dimensions = array<i32: 1>} : vector<8x7xi32>
    %42 = vector.broadcast %40 : vector<8x1xi32> to vector<8x7xi32>
    %43 = arith.cmpi eq, %41, %42 : vector<8x7xi32>
    %cst_19 = arith.constant 1.000000e+00 : f32
    %cst_20 = arith.constant 0.000000e+00 : f32
    %44 = vector.broadcast %cst_19 : f32 to vector<8x7xf32>
    %45 = vector.broadcast %cst_20 : f32 to vector<8x7xf32>
    %46 = arith.select %43, %44, %45 : vector<8x7xi1>, vector<8x7xf32>
    %c0_21 = arith.constant 0 : index
    %c0_22 = arith.constant 0 : index
    %47 = vector.load %arg9[%c0_21, %c0_22] : memref<7x32xf32, #tpu.memory_space<vmem>>, vector<7x32xf32>
    %48 = arith.truncf %46 : vector<8x7xf32> to vector<8x7xbf16>
    %49 = arith.truncf %47 : vector<7x32xf32> to vector<7x32xbf16>
    %cst_23 = arith.constant dense<0.000000e+00> : vector<8x32xf32>
    %50 = tpu.matmul %48, %49, %cst_23 {dimension_numbers = #tpu.dot_dimension_numbers<[1], [0], [0], [1], [0, 0, 1, 1], [], []>} : vector<8x7xbf16>, vector<7x32xbf16>, vector<8x32xf32> -> vector<8x32xf32>
    %51 = tpu.concatenate %38, %50 in 1 : vector<8x32xf32>, vector<8x32xf32> -> vector<8x64xf32>
    %c0_24 = arith.constant 0 : index
    %c0_25 = arith.constant 0 : index
    %52 = vector.load %arg10[%c0_24, %c0_25] : memref<8x8xf32, #tpu.memory_space<vmem>>, vector<8x8xf32>
    %c0_26 = arith.constant 0 : index
    %c0_27 = arith.constant 0 : index
    %53 = vector.load %arg11[%c0_26, %c0_27] : memref<8x8xf32, #tpu.memory_space<vmem>>, vector<8x8xf32>
    %54 = arith.truncf %52 : vector<8x8xf32> to vector<8x8xbf16>
    %55 = arith.truncf %51 : vector<8x64xf32> to vector<8x64xbf16>
    %cst_28 = arith.constant dense<0.000000e+00> : vector<8x64xf32>
    %56 = tpu.matmul %54, %55, %cst_28 {dimension_numbers = #tpu.dot_dimension_numbers<[1], [0], [0], [1], [0, 0, 1, 1], [], []>} : vector<8x8xbf16>, vector<8x64xbf16>, vector<8x64xf32> -> vector<8x64xf32>
    %57 = tpu.concatenate %30, %56 in 1 : vector<8x96xf32>, vector<8x64xf32> -> vector<8x160xf32>
    %c0_29 = arith.constant 0 : index
    %c0_30 = arith.constant 0 : index
    %58 = vector.load %arg12[%c0_29, %c0_30] : memref<160x64xf32, #tpu.memory_space<vmem>>, vector<160x64xf32>
    %59 = arith.truncf %57 : vector<8x160xf32> to vector<8x160xbf16>
    %60 = arith.truncf %58 : vector<160x64xf32> to vector<160x64xbf16>
    %cst_31 = arith.constant dense<0.000000e+00> : vector<8x64xf32>
    %61 = tpu.matmul %59, %60, %cst_31 {dimension_numbers = #tpu.dot_dimension_numbers<[1], [0], [0], [1], [0, 0, 1, 1], [], []>} : vector<8x160xbf16>, vector<160x64xbf16>, vector<8x64xf32> -> vector<8x64xf32>
    %c0_32 = arith.constant 0 : index
    %c0_33 = arith.constant 0 : index
    %62 = vector.load %arg13[%c0_32, %c0_33] : memref<1x64xf32, #tpu.memory_space<vmem>>, vector<1x64xf32>
    %63 = vector.broadcast %62 : vector<1x64xf32> to vector<8x64xf32>
    %64 = arith.addf %61, %63 : vector<8x64xf32>
    %cst_34 = arith.constant 0.000000e+00 : f32
    %65 = vector.broadcast %cst_34 : f32 to vector<8x64xf32>
    %66 = arith.maximumf %64, %65 : vector<8x64xf32>
    %67 = arith.truncf %53 : vector<8x8xf32> to vector<8x8xbf16>
    %68 = arith.truncf %30 : vector<8x96xf32> to vector<8x96xbf16>
    %cst_35 = arith.constant dense<0.000000e+00> : vector<8x96xf32>
    %69 = tpu.matmul %67, %68, %cst_35 {dimension_numbers = #tpu.dot_dimension_numbers<[1], [0], [0], [1], [0, 0, 1, 1], [], []>} : vector<8x8xbf16>, vector<8x96xbf16>, vector<8x96xf32> -> vector<8x96xf32>
    %70 = tpu.concatenate %51, %69 in 1 : vector<8x64xf32>, vector<8x96xf32> -> vector<8x160xf32>
    %c0_36 = arith.constant 0 : index
    %c0_37 = arith.constant 0 : index
    %71 = vector.load %arg14[%c0_36, %c0_37] : memref<160x64xf32, #tpu.memory_space<vmem>>, vector<160x64xf32>
    %72 = arith.truncf %70 : vector<8x160xf32> to vector<8x160xbf16>
    %73 = arith.truncf %71 : vector<160x64xf32> to vector<160x64xbf16>
    %cst_38 = arith.constant dense<0.000000e+00> : vector<8x64xf32>
    %74 = tpu.matmul %72, %73, %cst_38 {dimension_numbers = #tpu.dot_dimension_numbers<[1], [0], [0], [1], [0, 0, 1, 1], [], []>} : vector<8x160xbf16>, vector<160x64xbf16>, vector<8x64xf32> -> vector<8x64xf32>
    %c0_39 = arith.constant 0 : index
    %c0_40 = arith.constant 0 : index
    %75 = vector.load %arg15[%c0_39, %c0_40] : memref<1x64xf32, #tpu.memory_space<vmem>>, vector<1x64xf32>
    %76 = vector.broadcast %75 : vector<1x64xf32> to vector<8x64xf32>
    %77 = arith.addf %74, %76 : vector<8x64xf32>
    %cst_41 = arith.constant 0.000000e+00 : f32
    %78 = vector.broadcast %cst_41 : f32 to vector<8x64xf32>
    %79 = arith.maximumf %77, %78 : vector<8x64xf32>
    %80 = arith.truncf %52 : vector<8x8xf32> to vector<8x8xbf16>
    %81 = arith.truncf %79 : vector<8x64xf32> to vector<8x64xbf16>
    %cst_42 = arith.constant dense<0.000000e+00> : vector<8x64xf32>
    %82 = tpu.matmul %80, %81, %cst_42 {dimension_numbers = #tpu.dot_dimension_numbers<[1], [0], [0], [1], [0, 0, 1, 1], [], []>} : vector<8x8xbf16>, vector<8x64xbf16>, vector<8x64xf32> -> vector<8x64xf32>
    %83 = tpu.concatenate %66, %82 in 1 : vector<8x64xf32>, vector<8x64xf32> -> vector<8x128xf32>
    %c0_43 = arith.constant 0 : index
    %c0_44 = arith.constant 0 : index
    %84 = vector.load %arg16[%c0_43, %c0_44] : memref<128x32xf32, #tpu.memory_space<vmem>>, vector<128x32xf32>
    %85 = arith.truncf %83 : vector<8x128xf32> to vector<8x128xbf16>
    %86 = arith.truncf %84 : vector<128x32xf32> to vector<128x32xbf16>
    %cst_45 = arith.constant dense<0.000000e+00> : vector<8x32xf32>
    %87 = tpu.matmul %85, %86, %cst_45 {dimension_numbers = #tpu.dot_dimension_numbers<[1], [0], [0], [1], [0, 0, 1, 1], [], []>} : vector<8x128xbf16>, vector<128x32xbf16>, vector<8x32xf32> -> vector<8x32xf32>
    %c0_46 = arith.constant 0 : index
    %c0_47 = arith.constant 0 : index
    %88 = vector.load %arg17[%c0_46, %c0_47] : memref<1x32xf32, #tpu.memory_space<vmem>>, vector<1x32xf32>
    %89 = vector.broadcast %88 : vector<1x32xf32> to vector<8x32xf32>
    %90 = arith.addf %87, %89 : vector<8x32xf32>
    %cst_48 = arith.constant 0.000000e+00 : f32
    %91 = vector.broadcast %cst_48 : f32 to vector<8x32xf32>
    %92 = arith.maximumf %90, %91 : vector<8x32xf32>
    %c0_49 = arith.constant 0 : index
    %c0_50 = arith.constant 0 : index
    %93 = vector.load %arg18[%c0_49, %c0_50] : memref<32x128xf32, #tpu.memory_space<vmem>>, vector<32x128xf32>
    %94 = arith.truncf %92 : vector<8x32xf32> to vector<8x32xbf16>
    %95 = arith.truncf %93 : vector<32x128xf32> to vector<32x128xbf16>
    %cst_51 = arith.constant dense<0.000000e+00> : vector<8x128xf32>
    %96 = tpu.matmul %94, %95, %cst_51 {dimension_numbers = #tpu.dot_dimension_numbers<[1], [0], [0], [1], [0, 0, 1, 1], [], []>} : vector<8x32xbf16>, vector<32x128xbf16>, vector<8x128xf32> -> vector<8x128xf32>
    %c0_52 = arith.constant 0 : index
    %c0_53 = arith.constant 0 : index
    %97 = vector.load %arg19[%c0_52, %c0_53] : memref<1x128xf32, #tpu.memory_space<vmem>>, vector<1x128xf32>
    %98 = vector.broadcast %97 : vector<1x128xf32> to vector<8x128xf32>
    %99 = arith.addf %96, %98 : vector<8x128xf32>
    %c0_54 = arith.constant 0 : index
    %c0_55 = arith.constant 0 : index
    %100 = vector.load %arg20[%c0_54, %c0_55] : memref<8x128xf32, #tpu.memory_space<vmem>>, vector<8x128xf32>
    tpu.vector_store %arg20[%c0_54, %c0_55], %99 {strides = array<i32>} : memref<8x128xf32, #tpu.memory_space<vmem>>, vector<8x128xf32>,
    return
  }
}

</mosaic_0001>

<llo_original>
// kernel: model_forward.1
$region0: #{model_forward.1}
  #allocation0 [shape = 'u32[]', space=smem, size = 0x4, offset = 0x4, fixed_abs, tag = 'smem constant byte address 0x4 - core index']
  #allocation1 [shape = 'u32[144,128]{1,0:T(1,128)}', space=vmem, size = 0x12000, scoped, tag = 'internal scratch']
  %s0 = inlined_call_operand.vmem [shape: f32[8,3], index: 0, kind: input, shape index: {}]
  %s1 = inlined_call_operand.vmem [shape: f32[8,2], index: 1, kind: input, shape index: {}]
  %s2 = inlined_call_operand.vmem [shape: f32[1,32], index: 2, kind: input, shape index: {}]
  %s3 = inlined_call_operand.vmem [shape: f32[1,32], index: 3, kind: input, shape index: {}]
  %s4 = inlined_call_operand.vmem [shape: f32[1,32], index: 4, kind: input, shape index: {}]
  %s5 = inlined_call_operand.vmem [shape: f32[1,32], index: 5, kind: input, shape index: {}]
  %s6 = inlined_call_operand.vmem [shape: f32[5,32], index: 6, kind: input, shape index: {}]
  %s7 = inlined_call_operand.vmem [shape: f32[1,32], index: 7, kind: input, shape index: {}]
  %s8 = inlined_call_operand.vmem [shape: f32[1,32], index: 8, kind: input, shape index: {}]
  %s9 = inlined_call_operand.vmem [shape: f32[7,32], index: 9, kind: input, shape index: {}]
  %s10 = inlined_call_operand.vmem [shape: f32[8,8], index: 10, kind: input, shape index: {}]
  %s11 = inlined_call_operand.vmem [shape: f32[8,8], index: 11, kind: input, shape index: {}]
  %s12 = inlined_call_operand.vmem [shape: f32[160,64], index: 12, kind: input, shape index: {}]
  %s13 = inlined_call_operand.vmem [shape: f32[1,64], index: 13, kind: input, shape index: {}]
  %s14 = inlined_call_operand.vmem [shape: f32[160,64], index: 14, kind: input, shape index: {}]
  %s15 = inlined_call_operand.vmem [shape: f32[1,64], index: 15, kind: input, shape index: {}]
  %s16 = inlined_call_operand.vmem [shape: f32[128,32], index: 16, kind: input, shape index: {}]
  %s17 = inlined_call_operand.vmem [shape: f32[1,32], index: 17, kind: input, shape index: {}]
  %s18 = inlined_call_operand.vmem [shape: f32[32,128], index: 18, kind: input, shape index: {}]
  %s19 = inlined_call_operand.vmem [shape: f32[1,128], index: 19, kind: input, shape index: {}]
  %s20 = inlined_call_operand.hbm [shape: f32[8,128], index: 20, kind: output, shape index: {}]
  %s21 = sld [smem:[#allocation0]]
  $region90: #{model_forward.1} parent=0
    _
  %s23 = ssub.s32 1, %s21
  %s24 = scalar_select 0, %s23, %s21
  $region1: #{model_forward.1} parent=0
    #allocation2 [shape = 'u8[4096]{0}', space=vmem, size = 0x1000, scoped, tag = 'output window, operand 0, single buffered']
    #allocation3 [shape = 's32[1]{0}', space=sflag, size = 0x4, scoped, tag = 'scoped memory for model_forward.1']
    %25 = vsyncpa [#allocation3], 0
    // Predicated region
    $region2: #{model_forward.1} parent=1 // pred_check
      _
    $region3: #{model_forward.1} parent=1 // pred_check_branch
      %27 = sbr.rel (0) target = $region5
    $region4: #{model_forward.1} parent=1 // pred_region
      _
    $region5: #{model_forward.1} parent=1 // pred_fallthru
      _
    // Predicated region
    $region6: #{model_forward.1} parent=1 // pred_check
      _
    $region7: #{model_forward.1} parent=1 // pred_check_branch
      %29 = sbr.rel (0) target = $region9
    $region8: #{model_forward.1} parent=1 // pred_region
      _
    $region9: #{model_forward.1} parent=1 // pred_fallthru
      _
    // Predicated region
    $region10: #{model_forward.1} parent=1 // pred_check
      _
    $region11: #{model_forward.1} parent=1 // pred_check_branch
      %31 = sbr.rel (0) target = $region13
    $region12: #{model_forward.1} parent=1 // pred_region
      _
    $region13: #{model_forward.1} parent=1 // pred_fallthru
      _
    // Predicated region
    $region14: #{model_forward.1} parent=1 // pred_check
      _
    $region15: #{model_forward.1} parent=1 // pred_check_branch
      %33 = sbr.rel (0) target = $region17
    $region16: #{model_forward.1} parent=1 // pred_region
      _
    $region17: #{model_forward.1} parent=1 // pred_fallthru
      _
    // Predicated region
    $region18: #{model_forward.1} parent=1 // pred_check
      _
    $region19: #{model_forward.1} parent=1 // pred_check_branch
      %35 = sbr.rel (0) target = $region21
    $region20: #{model_forward.1} parent=1 // pred_region
      _
    $region21: #{model_forward.1} parent=1 // pred_fallthru
      _
    // Predicated region
    $region22: #{model_forward.1} parent=1 // pred_check
      _
    $region23: #{model_forward.1} parent=1 // pred_check_branch
      %37 = sbr.rel (0) target = $region25
    $region24: #{model_forward.1} parent=1 // pred_region
      _
    $region25: #{model_forward.1} parent=1 // pred_fallthru
      _
    // Predicated region
    $region26: #{model_forward.1} parent=1 // pred_check
      _
    $region27: #{model_forward.1} parent=1 // pred_check_branch
      %39 = sbr.rel (0) target = $region29
    $region28: #{model_forward.1} parent=1 // pred_region
      _
    $region29: #{model_forward.1} parent=1 // pred_fallthru
      _
    // Predicated region
    $region30: #{model_forward.1} parent=1 // pred_check
      _
    $region31: #{model_forward.1} parent=1 // pred_check_branch
      %41 = sbr.rel (0) target = $region33
    $region32: #{model_forward.1} parent=1 // pred_region
      _
    $region33: #{model_forward.1} parent=1 // pred_fallthru
      _
    // Predicated region
    $region34: #{model_forward.1} parent=1 // pred_check
      _
    $region35: #{model_forward.1} parent=1 // pred_check_branch
      %43 = sbr.rel (0) target = $region37
    $region36: #{model_forward.1} parent=1 // pred_region
      _
    $region37: #{model_forward.1} parent=1 // pred_fallthru
      _
    // Predicated region
    $region38: #{model_forward.1} parent=1 // pred_check
      _
    $region39: #{model_forward.1} parent=1 // pred_check_branch
      %45 = sbr.rel (0) target = $region41
    $region40: #{model_forward.1} parent=1 // pred_region
      _
    $region41: #{model_forward.1} parent=1 // pred_fallthru
      _
    // Predicated region
    $region42: #{model_forward.1} parent=1 // pred_check
      _
    $region43: #{model_forward.1} parent=1 // pred_check_branch
      %47 = sbr.rel (0) target = $region45
    $region44: #{model_forward.1} parent=1 // pred_region
      _
    $region45: #{model_forward.1} parent=1 // pred_fallthru
      _
    // Predicated region
    $region46: #{model_forward.1} parent=1 // pred_check
      _
    $region47: #{model_forward.1} parent=1 // pred_check_branch
      %49 = sbr.rel (0) target = $region49
    $region48: #{model_forward.1} parent=1 // pred_region
      _
    $region49: #{model_forward.1} parent=1 // pred_fallthru
      _
    // Predicated region
    $region50: #{model_forward.1} parent=1 // pred_check
      _
    $region51: #{model_forward.1} parent=1 // pred_check_branch
      %51 = sbr.rel (0) target = $region53
    $region52: #{model_forward.1} parent=1 // pred_region
      _
    $region53: #{model_forward.1} parent=1 // pred_fallthru
      _
    // Predicated region
    $region54: #{model_forward.1} parent=1 // pred_check
      _
    $region55: #{model_forward.1} parent=1 // pred_check_branch
      %53 = sbr.rel (0) target = $region57
    $region56: #{model_forward.1} parent=1 // pred_region
      _
    $region57: #{model_forward.1} parent=1 // pred_fallthru
      _
    // Predicated region
    $region58: #{model_forward.1} parent=1 // pred_check
      _
    $region59: #{model_forward.1} parent=1 // pred_check_branch
      %55 = sbr.rel (0) target = $region61
    $region60: #{model_forward.1} parent=1 // pred_region
      _
    $region61: #{model_forward.1} parent=1 // pred_fallthru
      _
    // Predicated region
    $region62: #{model_forward.1} parent=1 // pred_check
      _
    $region63: #{model_forward.1} parent=1 // pred_check_branch
      %57 = sbr.rel (0) target = $region65
    $region64: #{model_forward.1} parent=1 // pred_region
      _
    $region65: #{model_forward.1} parent=1 // pred_fallthru
      _
    // Predicated region
    $region66: #{model_forward.1} parent=1 // pred_check
      _
    $region67: #{model_forward.1} parent=1 // pred_check_branch
      %59 = sbr.rel (0) target = $region69
    $region68: #{model_forward.1} parent=1 // pred_region
      _
    $region69: #{model_forward.1} parent=1 // pred_fallthru
      _
    // Predicated region
    $region70: #{model_forward.1} parent=1 // pred_check
      _
    $region71: #{model_forward.1} parent=1 // pred_check_branch
      %61 = sbr.rel (0) target = $region73
    $region72: #{model_forward.1} parent=1 // pred_region
      _
    $region73: #{model_forward.1} parent=1 // pred_fallthru
      _
    // Predicated region
    $region74: #{model_forward.1} parent=1 // pred_check
      _
    $region75: #{model_forward.1} parent=1 // pred_check_branch
      %63 = sbr.rel (0) target = $region77
    $region76: #{model_forward.1} parent=1 // pred_region
      _
    $region77: #{model_forward.1} parent=1 // pred_fallthru
      _
    // Predicated region
    $region78: #{model_forward.1} parent=1 // pred_check
      _
    $region79: #{model_forward.1} parent=1 // pred_check_branch
      %65 = sbr.rel (0) target = $region81
    $region80: #{model_forward.1} parent=1 // pred_region
      _
    $region81: #{model_forward.1} parent=1 // pred_fallthru
      _
    %v67 = vld [vmem:[%s0] sm:$0xff]
    %v68 = vld [vmem:[%s1] sm:$0xff]
    %v69 = vld [vmem:[%s2] sm:$0x1]
    %71 = vset.pattern.permute.xlu0 0
    %72 = vperm.xlu0 %71, %v67
    %v73 = vpop.permute.xlu0 %72
    %v76 = vlaneseq
    %v77 = vshrl.u32 %v76, 7
    %v78 = vsub.s32 0, %v77
    %v79 = vrot.slane %v69, %v78
    %v81 = vmul.f32 %v73, %v79
    %v82 = vld [vmem:[%s3] sm:$0x1]
    %v84 = vlaneseq
    %v85 = vshrl.u32 %v84, 7
    %v86 = vsub.s32 0, %v85
    %v87 = vrot.slane %v82, %v86
    %v89 = vadd.f32 %v81, %v87
    %v90 = vld [vmem:[%s4] sm:$0x1]
    %91 = vset.pattern.permute.xlu0 1
    %92 = vperm.xlu0 %91, %v67
    %v93 = vpop.permute.xlu0 %92
    %v96 = vlaneseq
    %v97 = vshrl.u32 %v96, 7
    %v98 = vsub.s32 0, %v97
    %v99 = vrot.slane %v90, %v98
    %v101 = vmul.f32 %v93, %v99
    %v102 = vld [vmem:[%s5] sm:$0x1]
    %v104 = vlaneseq
    %v105 = vshrl.u32 %v104, 7
    %v106 = vsub.s32 0, %v105
    %v107 = vrot.slane %v102, %v106
    %v109 = vadd.f32 %v101, %v107
    %v110 = vcvt.f32.s32.to.zero.pseudo %v67
    %v111 = vlaneseq
    %v112 = vand.u32 %v111, 127
    %113 = vset.pattern.permute.xlu0 2
    %114 = vperm.xlu0 %113, %v110
    %v115 = vpop.permute.xlu0 %114
    %vm116 = vcmp.eq.s32.totalorder %v112, %v115
    %v117 = vsel %vm116, 1.0, 0.0
    %v118 = vld [vmem:[%s6] sm:$0x1f]
    %v119 = vpack.c.bf16 %v117, %v117
    %v120 = vpack.c.bf16 %v118, %v118
    %vm121 = vcmask 39936
    %v123 = vsel %vm121, %v119, 0
    %vm125 = vcmask 1041408
    %vm126 = vcmask 1042432
    %v127 = vsel %vm125, 4294967295, 65535
    %v128 = vsel %vm126, %v127, 0
    %v130 = vand.u32 %v120, %v128
    %132 = vmatprep.subr.bf16.mxu0 0
    %133 = vmatpush1.bf16.msra.mxu0 0
    %134 = vmatprep.subr.bf16.mxu0 0
    %135 = vmatpush1.bf16.msra.mxu0 0
    %136 = vmatprep.subr.bf16.mxu0 0
    %137 = vmatpush1.bf16.msra.mxu0 0
    %138 = vmatprep.subr.bf16.mxu0 0
    %139 = vmatpush1.bf16.msra.mxu0 0
    %140 = vmatprep.subr.bf16.mxu0 0
    %141 = vmatpush1.bf16.msra.mxu0 0
    %142 = vmatprep.subr.bf16.mxu0 0
    %143 = vmatpush1.bf16.msra.mxu0 0
    %144 = vmatprep.subr.bf16.mxu0 0
    %145 = vmatpush1.bf16.msra.mxu0 0
    %146 = vmatprep.subr.bf16.mxu0 0
    %147 = vmatpush1.bf16.msra.mxu0 %v130
    %148 = vmatprep.subr.bf16.mxu0 0
    %149 = vmatpush2.bf16.msra.mxu0 0
    %150 = vmatprep.subr.bf16.mxu0 0
    %151 = vmatpush2.bf16.msra.mxu0 0
    %152 = vmatprep.subr.bf16.mxu0 0
    %153 = vmatpush2.bf16.msra.mxu0 0
    %154 = vmatprep.subr.bf16.mxu0 0
    %155 = vmatpush2.bf16.msra.mxu0 0
    %156 = vmatprep.subr.bf16.mxu0 0
    %157 = vmatpush2.bf16.msra.mxu0 0
    %158 = vmatprep.subr.bf16.mxu0 0
    %159 = vmatpush2.bf16.msra.mxu0 0
    %160 = vmatprep.subr.bf16.mxu0 0
    %161 = vmatpush2.bf16.msra.mxu0 0
    %162 = vmatprep.subr.bf16.mxu0 0
    %163 = vmatpush2.bf16.msra.mxu0 0
    %164 = vmatprep.mubr.bf16.mxu0 0
    %165 = vmatmul.mubr.bf16.gmra.mxu0 %v123
    %v166 = vpop.f32.mrf.mxu0
    %v167 = vadd.f32 0.0, %v166
    %v168 = vpop.f32.mrf.mxu0
    %v169 = vpop.f32.mrf.mxu0
    %v170 = vpop.f32.mrf.mxu0
    %171 = vdwg.mxu0
    %173 = vrot.lane.b32.xlu0 %v109, 32
    %v174 = vpop.permute.xlu0 %173
    %177 = vrot.lane.b32.xlu0 %v167, 64
    %v178 = vpop.permute.xlu0 %177
    %vm180 = vcmask 261120
    %v181 = vsel %vm180, %v89, %v174
    %vm182 = vcmask 523264
    %v183 = vsel %vm182, %v181, %v178
    %v184 = vld [vmem:[%s7] sm:$0x1]
    %186 = vset.pattern.permute.xlu0 0
    %187 = vperm.xlu0 %186, %v68
    %v188 = vpop.permute.xlu0 %187
    %v191 = vlaneseq
    %v192 = vshrl.u32 %v191, 7
    %v193 = vsub.s32 0, %v192
    %v194 = vrot.slane %v184, %v193
    %v196 = vmul.f32 %v188, %v194
    %v197 = vld [vmem:[%s8] sm:$0x1]
    %v199 = vlaneseq
    %v200 = vshrl.u32 %v199, 7
    %v201 = vsub.s32 0, %v200
    %v202 = vrot.slane %v197, %v201
    %v204 = vadd.f32 %v196, %v202
    %v205 = vcvt.f32.s32.to.zero.pseudo %v68
    %206 = vset.pattern.permute.xlu0 1
    %207 = vperm.xlu0 %206, %v205
    %v208 = vpop.permute.xlu0 %207
    %vm209 = vcmp.eq.s32.totalorder %v112, %v208
    %v210 = vsel %vm209, 1.0, 0.0
    %v211 = vld [vmem:[%s9] sm:$0x7f]
    %v212 = vpack.c.bf16 %v210, %v210
    %v213 = vpack.c.bf16 %v211, %v211
    %vm214 = vcmask 56320
    %v216 = vsel %vm214, %v212, 0
    %vm218 = vcmask 1043456
    %v219 = vsel %vm126, 4294967295, 65535
    %v220 = vsel %vm218, %v219, 0
    %v222 = vand.u32 %v213, %v220
    %224 = vmatprep.subr.bf16.mxu0 0
    %225 = vmatpush1.bf16.msra.mxu0 0
    %226 = vmatprep.subr.bf16.mxu0 0
    %227 = vmatpush1.bf16.msra.mxu0 0
    %228 = vmatprep.subr.bf16.mxu0 0
    %229 = vmatpush1.bf16.msra.mxu0 0
    %230 = vmatprep.subr.bf16.mxu0 0
    %231 = vmatpush1.bf16.msra.mxu0 0
    %232 = vmatprep.subr.bf16.mxu0 0
    %233 = vmatpush1.bf16.msra.mxu0 0
    %234 = vmatprep.subr.bf16.mxu0 0
    %235 = vmatpush1.bf16.msra.mxu0 0
    %236 = vmatprep.subr.bf16.mxu0 0
    %237 = vmatpush1.bf16.msra.mxu0 0
    %238 = vmatprep.subr.bf16.mxu0 0
    %239 = vmatpush1.bf16.msra.mxu0 %v222
    %240 = vmatprep.subr.bf16.mxu0 0
    %241 = vmatpush2.bf16.msra.mxu0 0
    %242 = vmatprep.subr.bf16.mxu0 0
    %243 = vmatpush2.bf16.msra.mxu0 0
    %244 = vmatprep.subr.bf16.mxu0 0
    %245 = vmatpush2.bf16.msra.mxu0 0
    %246 = vmatprep.subr.bf16.mxu0 0
    %247 = vmatpush2.bf16.msra.mxu0 0
    %248 = vmatprep.subr.bf16.mxu0 0
    %249 = vmatpush2.bf16.msra.mxu0 0
    %250 = vmatprep.subr.bf16.mxu0 0
    %251 = vmatpush2.bf16.msra.mxu0 0
    %252 = vmatprep.subr.bf16.mxu0 0
    %253 = vmatpush2.bf16.msra.mxu0 0
    %254 = vmatprep.subr.bf16.mxu0 0
    %255 = vmatpush2.bf16.msra.mxu0 0
    %256 = vmatprep.mubr.bf16.mxu0 0
    %257 = vmatmul.mubr.bf16.gmra.mxu0 %v216
    %v258 = vpop.f32.mrf.mxu0
    %v259 = vadd.f32 0.0, %v258
    %v260 = vpop.f32.mrf.mxu0
    %v261 = vpop.f32.mrf.mxu0
    %v262 = vpop.f32.mrf.mxu0
    %263 = vdwg.mxu0
    %265 = vrot.lane.b32.xlu0 %v259, 32
    %v266 = vpop.permute.xlu0 %265
    %v268 = vsel %vm180, %v204, %v266
    %v269 = vld [vmem:[%s10] sm:$0xff]
    %v270 = vld [vmem:[%s11] sm:$0xff]
    %v271 = vpack.c.bf16 %v269, %v269
    %v272 = vpack.c.bf16 %v268, %v268
    %vm273 = vcmask 64512
    %v275 = vsel %vm273, %v271, 0
    %v278 = vsel %vm218, %v272, 0
    %280 = vmatprep.subr.bf16.mxu0 0
    %281 = vmatpush1.bf16.msra.mxu0 0
    %282 = vmatprep.subr.bf16.mxu0 0
    %283 = vmatpush1.bf16.msra.mxu0 0
    %284 = vmatprep.subr.bf16.mxu0 0
    %285 = vmatpush1.bf16.msra.mxu0 0
    %286 = vmatprep.subr.bf16.mxu0 0
    %287 = vmatpush1.bf16.msra.mxu0 0
    %288 = vmatprep.subr.bf16.mxu0 0
    %289 = vmatpush1.bf16.msra.mxu0 0
    %290 = vmatprep.subr.bf16.mxu0 0
    %291 = vmatpush1.bf16.msra.mxu0 0
    %292 = vmatprep.subr.bf16.mxu0 0
    %293 = vmatpush1.bf16.msra.mxu0 0
    %294 = vmatprep.subr.bf16.mxu0 0
    %295 = vmatpush1.bf16.msra.mxu0 %v278
    %296 = vmatprep.subr.bf16.mxu0 0
    %297 = vmatpush2.bf16.msra.mxu0 0
    %298 = vmatprep.subr.bf16.mxu0 0
    %299 = vmatpush2.bf16.msra.mxu0 0
    %300 = vmatprep.subr.bf16.mxu0 0
    %301 = vmatpush2.bf16.msra.mxu0 0
    %302 = vmatprep.subr.bf16.mxu0 0
    %303 = vmatpush2.bf16.msra.mxu0 0
    %304 = vmatprep.subr.bf16.mxu0 0
    %305 = vmatpush2.bf16.msra.mxu0 0
    %306 = vmatprep.subr.bf16.mxu0 0
    %307 = vmatpush2.bf16.msra.mxu0 0
    %308 = vmatprep.subr.bf16.mxu0 0
    %309 = vmatpush2.bf16.msra.mxu0 0
    %310 = vmatprep.subr.bf16.mxu0 0
    %311 = vmatpush2.bf16.msra.mxu0 0
    %312 = vmatprep.mubr.bf16.mxu0 0
    %313 = vmatmul.mubr.bf16.gmra.mxu0 %v275
    %v314 = vpop.f32.mrf.mxu0
    %v315 = vadd.f32 0.0, %v314
    %v316 = vpop.f32.mrf.mxu0
    %v317 = vpop.f32.mrf.mxu0
    %v318 = vpop.f32.mrf.mxu0
    %319 = vdwg.mxu0
    %321 = vrot.lane.b32.xlu0 %v315, 96
    %v322 = vpop.permute.xlu0 %321
    %vm324 = vcmask 785408
    %v325 = vsel %vm324, %v183, %v322
    %v326 = vld [vmem:[%s12] sm:$0xff]
    %v327 = vld [vmem:[%s12 + $0x8] sm:$0xff]
    %v328 = vld [vmem:[%s12 + $0x10] sm:$0xff]
    %v329 = vld [vmem:[%s12 + $0x18] sm:$0xff]
    %v330 = vld [vmem:[%s12 + $0x20] sm:$0xff]
    %v331 = vld [vmem:[%s12 + $0x28] sm:$0xff]
    %v332 = vld [vmem:[%s12 + $0x30] sm:$0xff]
    %v333 = vld [vmem:[%s12 + $0x38] sm:$0xff]
    %v334 = vld [vmem:[%s12 + $0x40] sm:$0xff]
    %v335 = vld [vmem:[%s12 + $0x48] sm:$0xff]
    %v336 = vld [vmem:[%s12 + $0x50] sm:$0xff]
    %v337 = vld [vmem:[%s12 + $0x58] sm:$0xff]
    %v338 = vld [vmem:[%s12 + $0x60] sm:$0xff]
    %v339 = vld [vmem:[%s12 + $0x68] sm:$0xff]
    %v340 = vld [vmem:[%s12 + $0x70] sm:$0xff]
    %v341 = vld [vmem:[%s12 + $0x78] sm:$0xff]
    %v342 = vld [vmem:[%s12 + $0x80] sm:$0xff]
    %v343 = vld [vmem:[%s12 + $0x88] sm:$0xff]
    %v344 = vld [vmem:[%s12 + $0x90] sm:$0xff]
    %v345 = vld [vmem:[%s12 + $0x98] sm:$0xff]
    %v346 = vpack.c.bf16 %v325, %v325
    %v347 = vpack.c.bf16 %v322, %v322
    %v348 = vpack.c.bf16 %v327, %v326
    %v349 = vpack.c.bf16 %v329, %v328
    %v350 = vpack.c.bf16 %v331, %v330
    %v351 = vpack.c.bf16 %v333, %v332
    %v352 = vpack.c.bf16 %v335, %v334
    %v353 = vpack.c.bf16 %v337, %v336
    %v354 = vpack.c.bf16 %v339, %v338
    %v355 = vpack.c.bf16 %v341, %v340
    %v356 = vpack.c.bf16 %v343, %v342
    %v357 = vpack.c.bf16 %v345, %v344
    %v358 = vld [vmem:[%s13] sm:$0x1]
    %v360 = vlaneseq
    %v361 = vshrl.u32 %v360, 7
    %v362 = vsub.s32 0, %v361
    %v363 = vrot.slane %v358, %v362
    %v366 = vsel %vm180, %v347, 0
    %368 = vmatprep.subr.bf16.mxu0 0
    %369 = vmatpush1.bf16.msra.mxu0 %v355
    %370 = vmatprep.subr.bf16.mxu0 0
    %371 = vmatpush1.bf16.msra.mxu0 %v354
    %372 = vmatprep.subr.bf16.mxu0 0
    %373 = vmatpush1.bf16.msra.mxu0 %v353
    %374 = vmatprep.subr.bf16.mxu0 0
    %375 = vmatpush1.bf16.msra.mxu0 %v352
    %376 = vmatprep.subr.bf16.mxu0 0
    %377 = vmatpush1.bf16.msra.mxu0 %v351
    %378 = vmatprep.subr.bf16.mxu0 0
    %379 = vmatpush1.bf16.msra.mxu0 %v350
    %380 = vmatprep.subr.bf16.mxu0 0
    %381 = vmatpush1.bf16.msra.mxu0 %v349
    %382 = vmatprep.subr.bf16.mxu0 0
    %383 = vmatpush1.bf16.msra.mxu0 %v348
    %384 = vmatprep.subr.bf16.mxu0 0
    %385 = vmatpush2.bf16.msra.mxu0 0
    %386 = vmatprep.subr.bf16.mxu0 0
    %387 = vmatpush2.bf16.msra.mxu0 0
    %388 = vmatprep.subr.bf16.mxu0 0
    %389 = vmatpush2.bf16.msra.mxu0 0
    %390 = vmatprep.subr.bf16.mxu0 0
    %391 = vmatpush2.bf16.msra.mxu0 0
    %392 = vmatprep.subr.bf16.mxu0 0
    %393 = vmatpush2.bf16.msra.mxu0 0
    %394 = vmatprep.subr.bf16.mxu0 0
    %395 = vmatpush2.bf16.msra.mxu0 0
    %396 = vmatprep.subr.bf16.mxu0 0
    %397 = vmatpush2.bf16.msra.mxu0 %v357
    %398 = vmatprep.subr.bf16.mxu0 0
    %399 = vmatpush2.bf16.msra.mxu0 %v356
    %400 = vmatprep.mubr.bf16.mxu0 %v366
    %401 = vmatmul.mubr.bf16.gmra.mxu0 %v346
    %v402 = vpop.f32.mrf.mxu0
    %v403 = vadd.f32 %v363, %v402
    %v404 = vpop.f32.mrf.mxu0
    %v405 = vpop.f32.mrf.mxu0
    %v406 = vpop.f32.mrf.mxu0
    %407 = vdwg.mxu0
    %v408 = vmax.f32 %v403, 0.0
    %v409 = vpack.c.bf16 %v270, %v270
    %v410 = vpack.c.bf16 %v183, %v183
    %v412 = vsel %vm273, %v409, 0
    %v415 = vsel %vm218, %v410, 0
    %417 = vmatprep.subr.bf16.mxu0 0
    %418 = vmatpush1.bf16.msra.mxu0 0
    %419 = vmatprep.subr.bf16.mxu0 0
    %420 = vmatpush1.bf16.msra.mxu0 0
    %421 = vmatprep.subr.bf16.mxu0 0
    %422 = vmatpush1.bf16.msra.mxu0 0
    %423 = vmatprep.subr.bf16.mxu0 0
    %424 = vmatpush1.bf16.msra.mxu0 0
    %425 = vmatprep.subr.bf16.mxu0 0
    %426 = vmatpush1.bf16.msra.mxu0 0
    %427 = vmatprep.subr.bf16.mxu0 0
    %428 = vmatpush1.bf16.msra.mxu0 0
    %429 = vmatprep.subr.bf16.mxu0 0
    %430 = vmatpush1.bf16.msra.mxu0 0
    %431 = vmatprep.subr.bf16.mxu0 0
    %432 = vmatpush1.bf16.msra.mxu0 %v415
    %433 = vmatprep.subr.bf16.mxu0 0
    %434 = vmatpush2.bf16.msra.mxu0 0
    %435 = vmatprep.subr.bf16.mxu0 0
    %436 = vmatpush2.bf16.msra.mxu0 0
    %437 = vmatprep.subr.bf16.mxu0 0
    %438 = vmatpush2.bf16.msra.mxu0 0
    %439 = vmatprep.subr.bf16.mxu0 0
    %440 = vmatpush2.bf16.msra.mxu0 0
    %441 = vmatprep.subr.bf16.mxu0 0
    %442 = vmatpush2.bf16.msra.mxu0 0
    %443 = vmatprep.subr.bf16.mxu0 0
    %444 = vmatpush2.bf16.msra.mxu0 0
    %445 = vmatprep.subr.bf16.mxu0 0
    %446 = vmatpush2.bf16.msra.mxu0 0
    %447 = vmatprep.subr.bf16.mxu0 0
    %448 = vmatpush2.bf16.msra.mxu0 0
    %449 = vmatprep.mubr.bf16.mxu0 0
    %450 = vmatmul.mubr.bf16.gmra.mxu0 %v412
    %v451 = vpop.f32.mrf.mxu0
    %v452 = vadd.f32 0.0, %v451
    %v453 = vpop.f32.mrf.mxu0
    %v454 = vpop.f32.mrf.mxu0
    %v455 = vpop.f32.mrf.mxu0
    %456 = vdwg.mxu0
    %458 = vrot.lane.b32.xlu0 %v452, 64
    %v459 = vpop.permute.xlu0 %458
    %v461 = vsel %vm182, %v268, %v459
    %v462 = vld [vmem:[%s14] sm:$0xff]
    %v463 = vld [vmem:[%s14 + $0x8] sm:$0xff]
    %v464 = vld [vmem:[%s14 + $0x10] sm:$0xff]
    %v465 = vld [vmem:[%s14 + $0x18] sm:$0xff]
    %v466 = vld [vmem:[%s14 + $0x20] sm:$0xff]
    %v467 = vld [vmem:[%s14 + $0x28] sm:$0xff]
    %v468 = vld [vmem:[%s14 + $0x30] sm:$0xff]
    %v469 = vld [vmem:[%s14 + $0x38] sm:$0xff]
    %v470 = vld [vmem:[%s14 + $0x40] sm:$0xff]
    %v471 = vld [vmem:[%s14 + $0x48] sm:$0xff]
    %v472 = vld [vmem:[%s14 + $0x50] sm:$0xff]
    %v473 = vld [vmem:[%s14 + $0x58] sm:$0xff]
    %v474 = vld [vmem:[%s14 + $0x60] sm:$0xff]
    %v475 = vld [vmem:[%s14 + $0x68] sm:$0xff]
    %v476 = vld [vmem:[%s14 + $0x70] sm:$0xff]
    %v477 = vld [vmem:[%s14 + $0x78] sm:$0xff]
    %v478 = vld [vmem:[%s14 + $0x80] sm:$0xff]
    %v479 = vld [vmem:[%s14 + $0x88] sm:$0xff]
    %v480 = vld [vmem:[%s14 + $0x90] sm:$0xff]
    %v481 = vld [vmem:[%s14 + $0x98] sm:$0xff]
    %v482 = vpack.c.bf16 %v461, %v461
    %v483 = vpack.c.bf16 %v459, %v459
    %v484 = vpack.c.bf16 %v463, %v462
    %v485 = vpack.c.bf16 %v465, %v464
    %v486 = vpack.c.bf16 %v467, %v466
    %v487 = vpack.c.bf16 %v469, %v468
    %v488 = vpack.c.bf16 %v471, %v470
    %v489 = vpack.c.bf16 %v473, %v472
    %v490 = vpack.c.bf16 %v475, %v474
    %v491 = vpack.c.bf16 %v477, %v476
    %v492 = vpack.c.bf16 %v479, %v478
    %v493 = vpack.c.bf16 %v481, %v480
    %v494 = vld [vmem:[%s15] sm:$0x1]
    %v496 = vlaneseq
    %v497 = vshrl.u32 %v496, 7
    %v498 = vsub.s32 0, %v497
    %v499 = vrot.slane %v494, %v498
    %v502 = vsel %vm180, %v483, 0
    %504 = vmatprep.subr.bf16.mxu0 0
    %505 = vmatpush1.bf16.msra.mxu0 %v491
    %506 = vmatprep.subr.bf16.mxu0 0
    %507 = vmatpush1.bf16.msra.mxu0 %v490
    %508 = vmatprep.subr.bf16.mxu0 0
    %509 = vmatpush1.bf16.msra.mxu0 %v489
    %510 = vmatprep.subr.bf16.mxu0 0
    %511 = vmatpush1.bf16.msra.mxu0 %v488
    %512 = vmatprep.subr.bf16.mxu0 0
    %513 = vmatpush1.bf16.msra.mxu0 %v487
    %514 = vmatprep.subr.bf16.mxu0 0
    %515 = vmatpush1.bf16.msra.mxu0 %v486
    %516 = vmatprep.subr.bf16.mxu0 0
    %517 = vmatpush1.bf16.msra.mxu0 %v485
    %518 = vmatprep.subr.bf16.mxu0 0
    %519 = vmatpush1.bf16.msra.mxu0 %v484
    %520 = vmatprep.subr.bf16.mxu0 0
    %521 = vmatpush2.bf16.msra.mxu0 0
    %522 = vmatprep.subr.bf16.mxu0 0
    %523 = vmatpush2.bf16.msra.mxu0 0
    %524 = vmatprep.subr.bf16.mxu0 0
    %525 = vmatpush2.bf16.msra.mxu0 0
    %526 = vmatprep.subr.bf16.mxu0 0
    %527 = vmatpush2.bf16.msra.mxu0 0
    %528 = vmatprep.subr.bf16.mxu0 0
    %529 = vmatpush2.bf16.msra.mxu0 0
    %530 = vmatprep.subr.bf16.mxu0 0
    %531 = vmatpush2.bf16.msra.mxu0 0
    %532 = vmatprep.subr.bf16.mxu0 0
    %533 = vmatpush2.bf16.msra.mxu0 %v493
    %534 = vmatprep.subr.bf16.mxu0 0
    %535 = vmatpush2.bf16.msra.mxu0 %v492
    %536 = vmatprep.mubr.bf16.mxu0 %v502
    %537 = vmatmul.mubr.bf16.gmra.mxu0 %v482
    %v538 = vpop.f32.mrf.mxu0
    %v539 = vadd.f32 %v499, %v538
    %v540 = vpop.f32.mrf.mxu0
    %v541 = vpop.f32.mrf.mxu0
    %v542 = vpop.f32.mrf.mxu0
    %543 = vdwg.mxu0
    %v544 = vmax.f32 %v539, 0.0
    %v545 = vpack.c.bf16 %v544, %v544
    %v547 = vsel %vm218, %v545, 0
    %549 = vmatprep.subr.bf16.mxu0 0
    %550 = vmatpush1.bf16.msra.mxu0 0
    %551 = vmatprep.subr.bf16.mxu0 0
    %552 = vmatpush1.bf16.msra.mxu0 0
    %553 = vmatprep.subr.bf16.mxu0 0
    %554 = vmatpush1.bf16.msra.mxu0 0
    %555 = vmatprep.subr.bf16.mxu0 0
    %556 = vmatpush1.bf16.msra.mxu0 0
    %557 = vmatprep.subr.bf16.mxu0 0
    %558 = vmatpush1.bf16.msra.mxu0 0
    %559 = vmatprep.subr.bf16.mxu0 0
    %560 = vmatpush1.bf16.msra.mxu0 0
    %561 = vmatprep.subr.bf16.mxu0 0
    %562 = vmatpush1.bf16.msra.mxu0 0
    %563 = vmatprep.subr.bf16.mxu0 0
    %564 = vmatpush1.bf16.msra.mxu0 %v547
    %565 = vmatprep.subr.bf16.mxu0 0
    %566 = vmatpush2.bf16.msra.mxu0 0
    %567 = vmatprep.subr.bf16.mxu0 0
    %568 = vmatpush2.bf16.msra.mxu0 0
    %569 = vmatprep.subr.bf16.mxu0 0
    %570 = vmatpush2.bf16.msra.mxu0 0
    %571 = vmatprep.subr.bf16.mxu0 0
    %572 = vmatpush2.bf16.msra.mxu0 0
    %573 = vmatprep.subr.bf16.mxu0 0
    %574 = vmatpush2.bf16.msra.mxu0 0
    %575 = vmatprep.subr.bf16.mxu0 0
    %576 = vmatpush2.bf16.msra.mxu0 0
    %577 = vmatprep.subr.bf16.mxu0 0
    %578 = vmatpush2.bf16.msra.mxu0 0
    %579 = vmatprep.subr.bf16.mxu0 0
    %580 = vmatpush2.bf16.msra.mxu0 0
    %581 = vmatprep.mubr.bf16.mxu0 0
    %582 = vmatmul.mubr.bf16.gmra.mxu0 %v275
    %v583 = vpop.f32.mrf.mxu0
    %v584 = vadd.f32 0.0, %v583
    %v585 = vpop.f32.mrf.mxu0
    %v586 = vpop.f32.mrf.mxu0
    %v587 = vpop.f32.mrf.mxu0
    %588 = vdwg.mxu0
    %590 = vrot.lane.b32.xlu0 %v584, 64
    %v591 = vpop.permute.xlu0 %590
    %v593 = vsel %vm182, %v408, %v591
    %v594 = vld [vmem:[%s16] sm:$0xff]
    %v595 = vld [vmem:[%s16 + $0x8] sm:$0xff]
    %v596 = vld [vmem:[%s16 + $0x10] sm:$0xff]
    %v597 = vld [vmem:[%s16 + $0x18] sm:$0xff]
    %v598 = vld [vmem:[%s16 + $0x20] sm:$0xff]
    %v599 = vld [vmem:[%s16 + $0x28] sm:$0xff]
    %v600 = vld [vmem:[%s16 + $0x30] sm:$0xff]
    %v601 = vld [vmem:[%s16 + $0x38] sm:$0xff]
    %v602 = vld [vmem:[%s16 + $0x40] sm:$0xff]
    %v603 = vld [vmem:[%s16 + $0x48] sm:$0xff]
    %v604 = vld [vmem:[%s16 + $0x50] sm:$0xff]
    %v605 = vld [vmem:[%s16 + $0x58] sm:$0xff]
    %v606 = vld [vmem:[%s16 + $0x60] sm:$0xff]
    %v607 = vld [vmem:[%s16 + $0x68] sm:$0xff]
    %v608 = vld [vmem:[%s16 + $0x70] sm:$0xff]
    %v609 = vld [vmem:[%s16 + $0x78] sm:$0xff]
    %v610 = vpack.c.bf16 %v593, %v593
    %v611 = vpack.c.bf16 %v595, %v594
    %v612 = vpack.c.bf16 %v597, %v596
    %v613 = vpack.c.bf16 %v599, %v598
    %v614 = vpack.c.bf16 %v601, %v600
    %v615 = vpack.c.bf16 %v603, %v602
    %v616 = vpack.c.bf16 %v605, %v604
    %v617 = vpack.c.bf16 %v607, %v606
    %v618 = vpack.c.bf16 %v609, %v608
    %v619 = vld [vmem:[%s17] sm:$0x1]
    %v621 = vlaneseq
    %v622 = vshrl.u32 %v621, 7
    %v623 = vsub.s32 0, %v622
    %v624 = vrot.slane %v619, %v623
    %626 = vmatprep.subr.bf16.mxu0 0
    %627 = vmatpush1.bf16.msra.mxu0 %v618
    %628 = vmatprep.subr.bf16.mxu0 0
    %629 = vmatpush1.bf16.msra.mxu0 %v617
    %630 = vmatprep.subr.bf16.mxu0 0
    %631 = vmatpush1.bf16.msra.mxu0 %v616
    %632 = vmatprep.subr.bf16.mxu0 0
    %633 = vmatpush1.bf16.msra.mxu0 %v615
    %634 = vmatprep.subr.bf16.mxu0 0
    %635 = vmatpush1.bf16.msra.mxu0 %v614
    %636 = vmatprep.subr.bf16.mxu0 0
    %637 = vmatpush1.bf16.msra.mxu0 %v613
    %638 = vmatprep.subr.bf16.mxu0 0
    %639 = vmatpush1.bf16.msra.mxu0 %v612
    %640 = vmatprep.subr.bf16.mxu0 0
    %641 = vmatpush1.bf16.msra.mxu0 %v611
    %642 = vmatprep.subr.bf16.mxu0 0
    %643 = vmatpush2.bf16.msra.mxu0 0
    %644 = vmatprep.subr.bf16.mxu0 0
    %645 = vmatpush2.bf16.msra.mxu0 0
    %646 = vmatprep.subr.bf16.mxu0 0
    %647 = vmatpush2.bf16.msra.mxu0 0
    %648 = vmatprep.subr.bf16.mxu0 0
    %649 = vmatpush2.bf16.msra.mxu0 0
    %650 = vmatprep.subr.bf16.mxu0 0
    %651 = vmatpush2.bf16.msra.mxu0 0
    %652 = vmatprep.subr.bf16.mxu0 0
    %653 = vmatpush2.bf16.msra.mxu0 0
    %654 = vmatprep.subr.bf16.mxu0 0
    %655 = vmatpush2.bf16.msra.mxu0 0
    %656 = vmatprep.subr.bf16.mxu0 0
    %657 = vmatpush2.bf16.msra.mxu0 0
    %658 = vmatprep.mubr.bf16.mxu0 0
    %659 = vmatmul.mubr.bf16.gmra.mxu0 %v610
    %v660 = vpop.f32.mrf.mxu0
    %v661 = vadd.f32 %v624, %v660
    %v662 = vpop.f32.mrf.mxu0
    %v663 = vpop.f32.mrf.mxu0
    %v664 = vpop.f32.mrf.mxu0
    %665 = vdwg.mxu0
    %v666 = vmax.f32 %v661, 0.0
    %v667 = vld [vmem:[%s18] sm:$0xff]
    %v668 = vld [vmem:[%s18 + $0x8] sm:$0xff]
    %v669 = vld [vmem:[%s18 + $0x10] sm:$0xff]
    %v670 = vld [vmem:[%s18 + $0x18] sm:$0xff]
    %v671 = vpack.c.bf16 %v666, %v666
    %v672 = vpack.c.bf16 %v668, %v667
    %v673 = vpack.c.bf16 %v670, %v669
    %v674 = vld [vmem:[%s19] sm:$0x1]
    %v676 = vlaneseq
    %v677 = vshrl.u32 %v676, 7
    %v678 = vsub.s32 0, %v677
    %v679 = vrot.slane %v674, %v678
    %v682 = vsel %vm180, %v671, 0
    %684 = vmatprep.subr.bf16.mxu0 0
    %685 = vmatpush1.bf16.msra.mxu0 0
    %686 = vmatprep.subr.bf16.mxu0 0
    %687 = vmatpush1.bf16.msra.mxu0 0
    %688 = vmatprep.subr.bf16.mxu0 0
    %689 = vmatpush1.bf16.msra.mxu0 0
    %690 = vmatprep.subr.bf16.mxu0 0
    %691 = vmatpush1.bf16.msra.mxu0 0
    %692 = vmatprep.subr.bf16.mxu0 0
    %693 = vmatpush1.bf16.msra.mxu0 0
    %694 = vmatprep.subr.bf16.mxu0 0
    %695 = vmatpush1.bf16.msra.mxu0 0
    %696 = vmatprep.subr.bf16.mxu0 0
    %697 = vmatpush1.bf16.msra.mxu0 %v673
    %698 = vmatprep.subr.bf16.mxu0 0
    %699 = vmatpush1.bf16.msra.mxu0 %v672
    %700 = vmatprep.subr.bf16.mxu0 0
    %701 = vmatpush2.bf16.msra.mxu0 0
    %702 = vmatprep.subr.bf16.mxu0 0
    %703 = vmatpush2.bf16.msra.mxu0 0
    %704 = vmatprep.subr.bf16.mxu0 0
    %705 = vmatpush2.bf16.msra.mxu0 0
    %706 = vmatprep.subr.bf16.mxu0 0
    %707 = vmatpush2.bf16.msra.mxu0 0
    %708 = vmatprep.subr.bf16.mxu0 0
    %709 = vmatpush2.bf16.msra.mxu0 0
    %710 = vmatprep.subr.bf16.mxu0 0
    %711 = vmatpush2.bf16.msra.mxu0 0
    %712 = vmatprep.subr.bf16.mxu0 0
    %713 = vmatpush2.bf16.msra.mxu0 0
    %714 = vmatprep.subr.bf16.mxu0 0
    %715 = vmatpush2.bf16.msra.mxu0 0
    %716 = vmatprep.mubr.bf16.mxu0 0
    %717 = vmatmul.mubr.bf16.gmra.mxu0 %v682
    %v718 = vpop.f32.mrf.mxu0
    %v719 = vadd.f32 %v679, %v718
    %v720 = vpop.f32.mrf.mxu0
    %v721 = vpop.f32.mrf.mxu0
    %v722 = vpop.f32.mrf.mxu0
    %723 = vdwg.mxu0
    %724 = vst [vmem:[#allocation2] sm:$0xff] %v719
    // Predicated region
    $region82: #{model_forward.1} parent=1 // pred_check
      _
    $region83: #{model_forward.1} parent=1 // pred_check_branch
      %726 = sbr.rel (0) target = $region85
    $region84: #{model_forward.1} parent=1 // pred_region
      %s728 = ssub.s32 128, 128
      %729 = vsyncadd [#allocation3], %s728
      %s731 = sshll.u32 [#allocation2], 4
      %s732 = int_to_ptr.vmem [resolvable:$true] %s731
      %734 = dma.vmem_to_hbm [thread:$0]  %s732, 128, %s20, [#allocation3]
    $region85: #{model_forward.1} parent=1 // pred_fallthru
      _
    // Predicated region
    $region86: #{model_forward.1} parent=1 // pred_check
      _
    $region87: #{model_forward.1} parent=1 // pred_check_branch
      %736 = sbr.rel (0) target = $region89
    $region88: #{model_forward.1} parent=1 // pred_region
      %737 = dma.done [#allocation3], 128
    $region89: #{model_forward.1} parent=1 // pred_fallthru
      _
    %738 = vsyncpa [#allocation3], 1

</llo_original>
